<compile_context>
chip_gen: v7x
topology: tpu7x:2x2x1
jax: 0.10.0
libtpu: 0.0.40
codegen_flags: <defaults>
</compile_context>

<pallas_src>
import jax
import jax.numpy as jnp
from jax.experimental import pallas as pl
from jax.experimental.pallas import tpu as pltpu

_LANE = 128
_SUBLANE = 8


def _ceil_to(x, m):
    return ((x + m - 1) // m) * m


def _floor_to(x, m):
    return (x // m) * m


def _add_kernel(a_ref, b_ref, o_ref):
    # VPU elementwise add; dtype promotion is done in-register (no HBM casts).
    # Broadcast operands arrive as (1,1,tc) / (1,1,1) blocks and are expanded
    # by jnp broadcasting inside VMEM.
    o_ref[...] = a_ref[...].astype(o_ref.dtype) + b_ref[...].astype(o_ref.dtype)


def add_pallas(signal_a, signal_b, *,
               target_tile_bytes=8 * 1024 * 1024,
               small_fallback_bytes=512 * 1024):
    """Elementwise add via a Pallas TPU kernel (== Add.forward)."""
    a = jnp.asarray(signal_a)
    b = jnp.asarray(signal_b)
    out_shape = jnp.broadcast_shapes(a.shape, b.shape)
    out_dtype = jnp.result_type(a, b)

    n = 1
    for d in out_shape:
        n *= int(d)

    # Tiny / empty outputs: XLA's fused elementwise add is strictly faster
    # than a pallas_call boundary plus a single grid step.
    if n * jnp.dtype(out_dtype).itemsize < small_fallback_bytes:
        return jnp.add(a, b)

    # ---- canonical 3-D view (L, R, C): drop trailing size-1 dims, keep the
    # last two real dims, collapse leading dims (all layout-free reshapes). ----
    n_trail_ones = 0
    for d in reversed(out_shape):
        if int(d) == 1:
            n_trail_ones += 1
        else:
            break
    eff_out = tuple(int(d) for d in out_shape[:len(out_shape) - n_trail_ones])

    if len(eff_out) == 1:
        L, R, C = 1, 1, eff_out[0]
    else:
        C = eff_out[-1]
        R = eff_out[-2]
        L = 1
        for d in eff_out[:-2]:
            L *= d

    def _eff(x):
        drop = min(n_trail_ones, x.ndim)
        return x.reshape(x.shape[:x.ndim - drop]) if drop else x

    a_e, b_e = _eff(a), _eff(b)

    # ---- tile sizes: lane-dense and (8,128)-legal.  Full last dim when it
    # fits the per-array budget, else 128-multiples with a masked edge block. ----
    max_item = max(a.dtype.itemsize, b.dtype.itemsize, jnp.dtype(out_dtype).itemsize)
    c_pad = _ceil_to(C, _LANE)
    max_lanes = max(_LANE, _floor_to(target_tile_bytes // (_SUBLANE * max_item), _LANE))
    if c_pad <= max_lanes:
        tc = C
        rows_budget = max(_SUBLANE,
                          _floor_to(target_tile_bytes // (c_pad * max_item), _SUBLANE))
        tr = R if _ceil_to(R, _SUBLANE) <= rows_budget else rows_budget
    else:
        tr = R if R < _SUBLANE else _SUBLANE
        tc = max_lanes

    # Guarantee >=2 grid steps for v7x megacore sharding / pipeline overlap on
    # mid-sized inputs that would otherwise collapse into a single block.
    if L * pl.cdiv(R, tr) * pl.cdiv(C, tc) == 1:
        if R >= 2 * _SUBLANE:
            tr = max(_SUBLANE, _floor_to(_ceil_to(R, _SUBLANE) // 2, _SUBLANE))
        elif C >= 2 * _LANE:
            tc = max(_LANE, _floor_to(_ceil_to(C, _LANE) // 2, _LANE))
    grid = (L, pl.cdiv(R, tr), pl.cdiv(C, tc))

    def _operand(x_eff):
        """Canonical 3-D operand + BlockSpec; None if the broadcast pattern is
        not a leading-dim / bias / scalar broadcast (handled by the fallback)."""
        xs = tuple(int(d) for d in x_eff.shape)
        if xs == eff_out:
            return (x_eff.reshape(L, R, C),
                    pl.BlockSpec((1, tr, tc), lambda l, r, c: (l, r, c)))
        core = xs
        while core and core[0] == 1:
            core = core[1:]
        k = len(core)
        if k == 0:                       # scalar operand: kept whole in VMEM
            return (x_eff.reshape(1, 1, 1),
                    pl.BlockSpec((1, 1, 1), lambda l, r, c: (0, 0, 0)))
        if core != eff_out[len(eff_out) - k:]:
            return None                  # broadcast not purely over leading dims
        if k == 1:                       # (C,) bias: broadcast over L and R
            return (x_eff.reshape(1, 1, C),
                    pl.BlockSpec((1, 1, tc), lambda l, r, c: (0, 0, c)))
        Ls = 1
        for d in core[:-2]:
            Ls *= int(d)
        x3 = x_eff.reshape(Ls, R, C)
        if Ls == 1:
            return x3, pl.BlockSpec((1, tr, tc), lambda l, r, c: (0, r, c))
        return x3, pl.BlockSpec((1, tr, tc), lambda l, r, c: (l % Ls, r, c))

    pa = _operand(a_e)
    pb = _operand(b_e)
    if pa is None or pb is None:
        # TODO(synk): broadcasts along non-leading dims fall back to XLA's fused
        # add (still never materializes the broadcast in HBM).
        return jnp.add(a, b)

    a3, a_spec = pa
    b3, b_spec = pb

    # Scoped-VMEM limit: 3 arrays x 2 pipeline buffers of padded blocks + headroom.
    blk_bytes = _ceil_to(tr, _SUBLANE) * _ceil_to(tc, _LANE) * max_item
    vmem_limit = max(32 << 20, 6 * blk_bytes + (4 << 20))   # <= ~52 MiB by construction

    out3 = pl.pallas_call(
        _add_kernel,
        out_shape=jax.ShapeDtypeStruct((L, R, C), out_dtype),
        grid=grid,
        in_specs=[a_spec, b_spec],
        out_specs=pl.BlockSpec((1, tr, tc), lambda l, r, c: (l, r, c)),
        compiler_params=pltpu.CompilerParams(
            dimension_semantics=("parallel", "parallel", "parallel"),
            vmem_limit_bytes=vmem_limit,
        ),
    )(a3, b3)

    return out3.reshape(out_shape)


class AddPallas:
    """Mirror of the diffsynth Add processor (no learnable parameters)."""

    def __init__(self, name: str = "add"):
        self.name = name
        self.param_desc = {
            "signal_a": {"size": 1, "range": (-1, 1), "type": "raw"},
            "signal_b": {"size": 1, "range": (-1, 1), "type": "raw"},
        }

    def __call__(self, signal_a, signal_b):
        return add_pallas(signal_a, signal_b)

    def process(self, scaled_params=(), **kwargs):
        # 'raw' scale_fn is identity, so process == forward here.
        return self(**kwargs)


def _check(out, ref):
    out = jax.block_until_ready(out)
    assert out.shape == ref.shape, (out.shape, ref.shape)
    assert out.dtype == ref.dtype, (out.dtype, ref.dtype)
    assert jnp.allclose(out, ref, atol=1e-5, rtol=1e-5)


if __name__ == "__main__":
    key = jax.random.PRNGKey(0)
    k = jax.random.split(key, 8)
    module = AddPallas()

    # 1) Same-shape audio batch (main kernel path, lane-dense full-width blocks).
    a1 = jax.random.uniform(k[0], (4, 48000), jnp.float32, minval=-1.0, maxval=1.0)
    b1 = jax.random.uniform(k[1], (4, 48000), jnp.float32, minval=-1.0, maxval=1.0)
    _check(module.process(signal_a=a1, signal_b=b1), a1 + b1)

    # 2) Ragged dims (3, 50001): masked boundary blocks, no pad / slice copies.
    a2 = jax.random.uniform(k[2], (3, 50001), jnp.float32, minval=-1.0, maxval=1.0)
    b2 = jax.random.uniform(k[3], (3, 50001), jnp.float32, minval=-1.0, maxval=1.0)
    _check(module.process(signal_a=a2, signal_b=b2), a2 + b2)

    # 3) Scalar (Python float) broadcast handled in-kernel.
    _check(module.process(signal_a=a1, signal_b=0.25), a1 + 0.25)

    # 4) (C,) bias broadcast + bf16 -> f32 promotion, in-kernel.
    a4 = jax.random.uniform(k[4], (2, 6, 48000), jnp.float32, minval=-1.0, maxval=1.0)
    b4 = jax.random.uniform(k[5], (48000,), jnp.float32, minval=-1.0, maxval=1.0).astype(jnp.bfloat16)
    _check(module.process(signal_a=a4, signal_b=b4), a4 + b4)

    # 5) Leading-dim broadcast (Ls > 1) handled by the `l % Ls` index_map.
    a5 = jax.random.uniform(k[6], (2, 3, 16, 5120), jnp.float32, minval=-1.0, maxval=1.0)
    b5 = jax.random.uniform(k[7], (3, 16, 5120), jnp.float32, minval=-1.0, maxval=1.0)
    _check(module.process(signal_a=a5, signal_b=b5), a5 + b5)

    # 6) Tiny buffer: fast path (fused XLA add).
    _check(module.process(signal_a=a1[:2, :1024], signal_b=b1[:2, :1024]),
           a1[:2, :1024] + b1[:2, :1024])

    print("KERNEL_OK")
</pallas_src>

<mosaic_0001>
module attributes {stable_mosaic.version = 11 : i64} {
  func.func @_add_kernel(%arg0: i32, %arg1: i32, %arg2: i32, %arg3: memref<1x4x23936xf32, #tpu.memory_space<vmem>>, %arg4: memref<1x4x23936xf32, #tpu.memory_space<vmem>>, %arg5: memref<1x4x23936xf32, #tpu.memory_space<vmem>>) attributes {dimension_semantics = [#tpu.dimension_semantics<parallel>, #tpu.dimension_semantics<parallel>, #tpu.dimension_semantics<parallel>], iteration_bounds = array<i64: 1, 1, 3>, scalar_prefetch = 0 : i64, scratch_operands = 0 : i64, tpu.core_type = #tpu.core_type<tc>, window_params = [{transform_indices = @transform_0, window_bounds = array<i64: 1, 4, 23936>}, {transform_indices = @transform_1, window_bounds = array<i64: 1, 4, 23936>}, {transform_indices = @transform_2, window_bounds = array<i64: 1, 4, 23936>}]} {
    %c0 = arith.constant 0 : index
    %c0_0 = arith.constant 0 : index
    %c0_1 = arith.constant 0 : index
    %0 = vector.load %arg3[%c0, %c0_0, %c0_1] : memref<1x4x23936xf32, #tpu.memory_space<vmem>>, vector<1x4x23936xf32>
    %c0_2 = arith.constant 0 : index
    %c0_3 = arith.constant 0 : index
    %c0_4 = arith.constant 0 : index
    %1 = vector.load %arg4[%c0_2, %c0_3, %c0_4] : memref<1x4x23936xf32, #tpu.memory_space<vmem>>, vector<1x4x23936xf32>
    %2 = arith.addf %0, %1 : vector<1x4x23936xf32>
    %c0_5 = arith.constant 0 : index
    %c0_6 = arith.constant 0 : index
    %c0_7 = arith.constant 0 : index
    %3 = vector.load %arg5[%c0_5, %c0_6, %c0_7] : memref<1x4x23936xf32, #tpu.memory_space<vmem>>, vector<1x4x23936xf32>
    tpu.vector_store %arg5[%c0_5, %c0_6, %c0_7], %2 {strides = array<i32>} : memref<1x4x23936xf32, #tpu.memory_space<vmem>>, vector<1x4x23936xf32>,
    return
  }
  func.func @transform_0(%arg0: i32, %arg1: i32, %arg2: i32) -> (i32, i32, i32) {
    %c0_i32 = arith.constant 0 : i32
    return %arg0, %arg1, %arg2 : i32, i32, i32
  }
  func.func @transform_1(%arg0: i32, %arg1: i32, %arg2: i32) -> (i32, i32, i32) {
    %c0_i32 = arith.constant 0 : i32
    return %arg0, %arg1, %arg2 : i32, i32, i32
  }
  func.func @transform_2(%arg0: i32, %arg1: i32, %arg2: i32) -> (i32, i32, i32) {
    %c0_i32 = arith.constant 0 : i32
    return %arg0, %arg1, %arg2 : i32, i32, i32
  }
}

</mosaic_0001>

<llo_original>
// kernel: tpu_custom_call.1
$region0: #{tpu_custom_call.1}
  #allocation0 [shape = 'u32[]', space=smem, size = 0x4, offset = 0x4, fixed_abs, tag = 'smem constant byte address 0x4 - core index']
  #allocation1 [shape = 'u32[144,128]{1,0:T(1,128)}', space=vmem, size = 0x12000, scoped, tag = 'internal scratch']
  %s0 = inlined_call_operand.hbm [shape: f32[1,4,48000], index: 0, kind: input, shape index: {}]
  %s1 = inlined_call_operand.hbm [shape: f32[1,4,48000], index: 1, kind: input, shape index: {}]
  %s2 = inlined_call_operand.hbm [shape: f32[1,4,48000], index: 2, kind: output, shape index: {}]
  %s3 = sld [smem:[#allocation0]]
  $region49: #{tpu_custom_call.1} parent=0
    _
  %s5 = ssub.s32 1, %s3
  %s6 = scalar_select 0, %s5, %s3
  $region1: #{tpu_custom_call.1} parent=0
    #allocation2 [shape = 'u8[765952]{0}', space=vmem, size = 0xbb000, scoped, tag = 'input window, operand 0']
    #allocation3 [shape = 's32[2]{0}', space=sflag, size = 0x8, scoped, tag = 'scoped memory for tpu_custom_call.1']
    #allocation4 [shape = 's32[2]{0}', space=sflag, size = 0x8, scoped, tag = 'scoped memory for tpu_custom_call.1']
    #allocation5 [shape = 'u8[765952]{0}', space=vmem, size = 0xbb000, scoped, tag = 'input window, operand 1']
    #allocation6 [shape = 's32[2]{0}', space=sflag, size = 0x8, scoped, tag = 'scoped memory for tpu_custom_call.1']
    #allocation7 [shape = 'u8[765952]{0}', space=vmem, size = 0xbb000, scoped, tag = 'output window, operand 0']
    %7 = vsyncpa [#allocation3], 0
    %s8 = scalar_lea.sflag [#allocation3], 1
    %9 = vsyncpa %s8, 0
    %10 = vsyncpa [#allocation6], 0
    %s11 = scalar_lea.sflag [#allocation6], 1
    %12 = vsyncpa %s11, 0
    %13 = vsyncpa [#allocation4], 0
    %s14 = scalar_lea.sflag [#allocation4], 1
    %15 = vsyncpa %s14, 0
    loop: start=0, step=1, limit=5
    $region2: #{tpu_custom_call.1} parent=1 // loop_pre_header
      _
    $region3: #{tpu_custom_call.1} parent=1 // loop_header
      %s17 = sphi 0, %s21
      %p18 = scmp.ge.s32.totalorder %s17, 5
      %s24 = sphi 0, %s43
      %s25 = sphi 0, %s39
      %s26 = sphi 0, %s35
      %s27 = sphi 0, %s24
      %s28 = sphi 0, %s25
      %s29 = sphi 0, %s26
      %s30 = sphi 0, %s27
      %s31 = sphi 0, %s28
      %s32 = sphi 0, %s29
      %s50 = sphi 0, %s52
      %s53 = sphi 0, %s50
      %s54 = sphi 0, %s53
      %s70 = sphi 0, %s54
      %s80 = sphi 0, %s82
      %s83 = sphi 0, %s80
      %s84 = sphi 0, %s83
      %s100 = sphi 0, %s84
      %s110 = sphi 0, %s112
      %s113 = sphi 0, %s110
      %s114 = sphi 0, %s113
      %s130 = sphi 0, %s114
    $region4: #{tpu_custom_call.1} parent=1 // loop_header_branch
      %20 = sbr.rel (%p18) target = $region8
    $region5: #{tpu_custom_call.1} parent=1 // loop_body
      %s22 = ssub.s32 %s17, 1
      %s23 = ssub.s32 %s17, 2
      %s33 = sadd.s32 1, %s26
      %p34 = scmp.ge.s32.totalorder %s33, 3
      %s35 = scalar_select %p34, 0, %s33
      %s36 = sadd.s32 1, %s25
      %s37 = scalar_select %p34, %s36, %s25
      %p38 = scmp.ge.s32.totalorder %s37, 1
      %s39 = scalar_select %p38, 0, %s37
      %s40 = sadd.s32 1, %s24
      %s41 = scalar_select %p38, %s40, %s24
      %p42 = scmp.ge.s32.totalorder %s41, 1
      %s43 = scalar_select %p42, 0, %s41
      %s44 = ssub.s32 %s24, %s43
      %s45 = ssub.s32 %s25, %s39
      %s46 = sor.u32 %s44, %s45
      %s47 = ssub.s32 %s26, %s35
      %s48 = sor.u32 %s46, %s47
      %p49 = scmp.eq.s32.totalorder %s48, 0
      %s51 = sadd.s32 %s50, 1
      %s52 = scalar_select %p49, %s50, %s51
      %p55 = pneg %p49
      %p56 = scmp.eq.s32.totalorder %s17, 2
      %p57 = por %p55, %p56
      %p58 = scmp.ne.s32.totalorder %s50, %s53
      %p59 = scmp.eq.s32.totalorder %s17, 0
      %p60 = por %p58, %p59
      %p61 = scmp.ne.s32.totalorder %s50, %s53
      %p62 = scmp.eq.s32.totalorder %s22, 2
      %p63 = por %p61, %p62
      %p64 = scmp.ne.s32.totalorder %s53, %s54
      %p65 = scmp.eq.s32.totalorder %s22, 0
      %p66 = por %p64, %p65
      %p67 = scmp.ne.s32.totalorder %s53, %s54
      %p68 = scmp.eq.s32.totalorder %s23, 2
      %p69 = por %p67, %p68
      %p71 = scmp.ne.s32.totalorder %s54, %s70
      %p72 = scmp.eq.s32.totalorder %s23, 0
      %p73 = por %p71, %p72
      %s74 = ssub.s32 %s24, %s43
      %s75 = ssub.s32 %s25, %s39
      %s76 = sor.u32 %s74, %s75
      %s77 = ssub.s32 %s26, %s35
      %s78 = sor.u32 %s76, %s77
      %p79 = scmp.eq.s32.totalorder %s78, 0
      %s81 = sadd.s32 %s80, 1
      %s82 = scalar_select %p79, %s80, %s81
      %p85 = pneg %p79
      %p86 = scmp.eq.s32.totalorder %s17, 2
      %p87 = por %p85, %p86
      %p88 = scmp.ne.s32.totalorder %s80, %s83
      %p89 = scmp.eq.s32.totalorder %s17, 0
      %p90 = por %p88, %p89
      %p91 = scmp.ne.s32.totalorder %s80, %s83
      %p92 = scmp.eq.s32.totalorder %s22, 2
      %p93 = por %p91, %p92
      %p94 = scmp.ne.s32.totalorder %s83, %s84
      %p95 = scmp.eq.s32.totalorder %s22, 0
      %p96 = por %p94, %p95
      %p97 = scmp.ne.s32.totalorder %s83, %s84
      %p98 = scmp.eq.s32.totalorder %s23, 2
      %p99 = por %p97, %p98
      %p101 = scmp.ne.s32.totalorder %s84, %s100
      %p102 = scmp.eq.s32.totalorder %s23, 0
      %p103 = por %p101, %p102
      %s104 = ssub.s32 %s24, %s43
      %s105 = ssub.s32 %s25, %s39
      %s106 = sor.u32 %s104, %s105
      %s107 = ssub.s32 %s26, %s35
      %s108 = sor.u32 %s106, %s107
      %p109 = scmp.eq.s32.totalorder %s108, 0
      %s111 = sadd.s32 %s110, 1
      %s112 = scalar_select %p109, %s110, %s111
      %p115 = pneg %p109
      %p116 = scmp.eq.s32.totalorder %s17, 2
      %p117 = por %p115, %p116
      %p118 = scmp.ne.s32.totalorder %s110, %s113
      %p119 = scmp.eq.s32.totalorder %s17, 0
      %p120 = por %p118, %p119
      %p121 = scmp.ne.s32.totalorder %s110, %s113
      %p122 = scmp.eq.s32.totalorder %s22, 2
      %p123 = por %p121, %p122
      %p124 = scmp.ne.s32.totalorder %s113, %s114
      %p125 = scmp.eq.s32.totalorder %s22, 0
      %p126 = por %p124, %p125
      %p127 = scmp.ne.s32.totalorder %s113, %s114
      %p128 = scmp.eq.s32.totalorder %s23, 2
      %p129 = por %p127, %p128
      %p131 = scmp.ne.s32.totalorder %s114, %s130
      %p132 = scmp.eq.s32.totalorder %s23, 0
      %p133 = por %p131, %p132
      %p134 = scmp.le.s32.totalorder 1, %s17
      %p135 = scmp.lt.s32.totalorder %s17, 4
      %p136 = pnand %p134, %p135
      %p137 = pneg %p136
      // Predicated region
      $region9: #{tpu_custom_call.1} parent=5 // pred_check
        _
      $region10: #{tpu_custom_call.1} parent=5 // pred_check_branch
        %139 = sbr.rel (%p136) target = $region12
      $region11: #{tpu_custom_call.1} parent=5 // pred_region
        %s140 = ssub.s32 %s17, 1
      $region12: #{tpu_custom_call.1} parent=5 // pred_fallthru
        _
      %p141 = scmp.lt.s32.totalorder %s17, 3
      // Predicated region
      $region13: #{tpu_custom_call.1} parent=5 // pred_check
        %p142 = pneg %p141
      $region14: #{tpu_custom_call.1} parent=5 // pred_check_branch
        %144 = sbr.rel (%p142) target = $region16
      $region15: #{tpu_custom_call.1} parent=5 // pred_region
        // Predicated region
        $region17: #{tpu_custom_call.1} parent=15 // pred_check
          %p145 = pneg %p60
        $region18: #{tpu_custom_call.1} parent=15 // pred_check_branch
          %147 = sbr.rel (%p145) target = $region20
        $region19: #{tpu_custom_call.1} parent=15 // pred_region
          %s148 = sand.u32 %s50, 1
          %s149 = scalar_lea.sflag [#allocation3], %s148
          %s150 = sand.u32 %s50, 1
          %s151 = smul.addr %s150, 748
          %s152 = scalar_lea.vmem [#allocation2], %s151
          %s153 = smul.u32 187, %s26
          %s154 = ssub.s32 375, %s153
          %p155 = scmp.lt.s32.totalorder %s154, 187
          %s156 = scalar_select %p155, %s154, 187
          %s157 = smul.u32 64, %s156
          %s159 = ssub.s32 11968, %s157
          %160 = vsyncadd %s149, %s159
          %p161 = scmp.ne.s32.totalorder 0, %s157
          %s162 = smul.addr %s25, 375
          %s163 = sadd.s32 %s153, %s162
          %s164 = smul.addr %s24, 375
          %s165 = sadd.s32 %s163, %s164
          %s166 = smul.addr %s165, 64
          %s167 = scalar_lea.hbm %s0, %s166
          %s168 = smul.u32 %s156, 4
          %s169 = sshll.u32 %s168, 4
          %s170 = sshll.u32 %s152, 4
          %s171 = int_to_ptr.vmem [resolvable:$true] %s170
          %173 = dma.hbm_to_vmem [thread:$0]  (%p161), %s167, %s169, %s171, %s149
        $region20: #{tpu_custom_call.1} parent=15 // pred_fallthru
          _
        // Predicated region
        $region21: #{tpu_custom_call.1} parent=15 // pred_check
          %p174 = pneg %p90
        $region22: #{tpu_custom_call.1} parent=15 // pred_check_branch
          %176 = sbr.rel (%p174) target = $region24
        $region23: #{tpu_custom_call.1} parent=15 // pred_region
          %s177 = sand.u32 %s80, 1
          %s178 = scalar_lea.sflag [#allocation6], %s177
          %s179 = sand.u32 %s80, 1
          %s180 = smul.addr %s179, 748
          %s181 = scalar_lea.vmem [#allocation5], %s180
          %s182 = smul.u32 187, %s26
          %s183 = ssub.s32 375, %s182
          %p184 = scmp.lt.s32.totalorder %s183, 187
          %s185 = scalar_select %p184, %s183, 187
          %s186 = smul.u32 64, %s185
          %s188 = ssub.s32 11968, %s186
          %189 = vsyncadd %s178, %s188
          %p190 = scmp.ne.s32.totalorder 0, %s186
          %s191 = smul.addr %s25, 375
          %s192 = sadd.s32 %s182, %s191
          %s193 = smul.addr %s24, 375
          %s194 = sadd.s32 %s192, %s193
          %s195 = smul.addr %s194, 64
          %s196 = scalar_lea.hbm %s1, %s195
          %s197 = smul.u32 %s185, 4
          %s198 = sshll.u32 %s197, 4
          %s199 = sshll.u32 %s181, 4
          %s200 = int_to_ptr.vmem [resolvable:$true] %s199
          %202 = dma.hbm_to_vmem [thread:$0]  (%p190), %s196, %s198, %s200, %s178
        $region24: #{tpu_custom_call.1} parent=15 // pred_fallthru
          _
      $region16: #{tpu_custom_call.1} parent=5 // pred_fallthru
        _
      %p203 = scmp.le.s32.totalorder 1, %s17
      %p204 = scmp.lt.s32.totalorder %s17, 4
      %p205 = pnand %p203, %p204
      %p206 = pneg %p205
      // Predicated region
      $region25: #{tpu_custom_call.1} parent=5 // pred_check
        _
      $region26: #{tpu_custom_call.1} parent=5 // pred_check_branch
        %208 = sbr.rel (%p205) target = $region28
      $region27: #{tpu_custom_call.1} parent=5 // pred_region
        %s209 = ssub.s32 %s17, 1
        %s210 = sand.u32 %s53, 1
        %s211 = scalar_lea.sflag [#allocation3], %s210
        %s212 = sand.u32 %s53, 1
        %s213 = smul.addr %s212, 748
        %s214 = scalar_lea.vmem [#allocation2], %s213
        // Predicated region
        $region29: #{tpu_custom_call.1} parent=27 // pred_check
          %p215 = pneg %p66
        $region30: #{tpu_custom_call.1} parent=27 // pred_check_branch
          %217 = sbr.rel (%p215) target = $region32
        $region31: #{tpu_custom_call.1} parent=27 // pred_region
          %218 = dma.done %s211, 11968
        $region32: #{tpu_custom_call.1} parent=27 // pred_fallthru
          _
        %s219 = sand.u32 %s83, 1
        %s220 = scalar_lea.sflag [#allocation6], %s219
        %s221 = sand.u32 %s83, 1
        %s222 = smul.addr %s221, 748
        %s223 = scalar_lea.vmem [#allocation5], %s222
        // Predicated region
        $region33: #{tpu_custom_call.1} parent=27 // pred_check
          %p224 = pneg %p96
        $region34: #{tpu_custom_call.1} parent=27 // pred_check_branch
          %226 = sbr.rel (%p224) target = $region36
        $region35: #{tpu_custom_call.1} parent=27 // pred_region
          %227 = dma.done %s220, 11968
        $region36: #{tpu_custom_call.1} parent=27 // pred_fallthru
          _
        %s228 = sand.u32 %s53, 1
        %s229 = scalar_lea.sflag [#allocation3], %s228
        %s230 = sand.u32 %s53, 1
        %s231 = smul.addr %s230, 748
        %s232 = scalar_lea.vmem [#allocation2], %s231
        %p233 = pneg %p66
        %p234 = pneg %p63
        %s235 = sand.u32 %s83, 1
        %s236 = scalar_lea.sflag [#allocation6], %s235
        %s237 = sand.u32 %s83, 1
        %s238 = smul.addr %s237, 748
        %s239 = scalar_lea.vmem [#allocation5], %s238
        %p240 = pneg %p96
        %p241 = pneg %p93
        %p242 = pneg %p126
        %p243 = pneg %p123
        %s244 = sand.u32 %s113, 1
        %s245 = scalar_lea.sflag [#allocation4], %s244
        %s246 = sand.u32 %s113, 1
        %s247 = smul.addr %s246, 748
        %s248 = scalar_lea.vmem [#allocation7], %s247
        %s249 = smul.u32 187, %s29
        %s250 = ssub.s32 375, %s249
        %p251 = scmp.lt.s32.totalorder %s250, 187
        %s252 = scalar_select %p251, %s250, 187
        %s253 = smul.u32 64, %s252
        %s254 = smul.u32 187, %s29
        %s255 = ssub.s32 375, %s254
        %p256 = scmp.lt.s32.totalorder %s255, 187
        %s257 = scalar_select %p256, %s255, 187
        %s258 = smul.u32 64, %s257
        %s259 = smul.u32 187, %s29
        %s260 = ssub.s32 375, %s259
        %p261 = scmp.lt.s32.totalorder %s260, 187
        %s262 = scalar_select %p261, %s260, 187
        %s263 = smul.u32 64, %s262
        %v264 = vld [vmem:[%s214] sm:$0xff]
        %v265 = vld [vmem:[%s214 + $0x8] sm:$0xff]
        %v266 = vld [vmem:[%s214 + $0x10] sm:$0xff]
        %v267 = vld [vmem:[%s214 + $0x18] sm:$0xff]
        %v268 = vld [vmem:[%s214 + $0x20] sm:$0xff]
        %v269 = vld [vmem:[%s214 + $0x28] sm:$0xff]
        %v270 = vld [vmem:[%s214 + $0x30] sm:$0xff]
        %v271 = vld [vmem:[%s214 + $0x38] sm:$0xff]
        %v272 = vld [vmem:[%s214 + $0x40] sm:$0xff]
        %v273 = vld [vmem:[%s214 + $0x48] sm:$0xff]
        %v274 = vld [vmem:[%s214 + $0x50] sm:$0xff]
        %v275 = vld [vmem:[%s214 + $0x58] sm:$0xff]
        %v276 = vld [vmem:[%s214 + $0x60] sm:$0xff]
        %v277 = vld [vmem:[%s214 + $0x68] sm:$0xff]
        %v278 = vld [vmem:[%s214 + $0x70] sm:$0xff]
        %v279 = vld [vmem:[%s214 + $0x78] sm:$0xff]
        %v280 = vld [vmem:[%s214 + $0x80] sm:$0xff]
        %v281 = vld [vmem:[%s214 + $0x88] sm:$0xff]
        %v282 = vld [vmem:[%s214 + $0x90] sm:$0xff]
        %v283 = vld [vmem:[%s214 + $0x98] sm:$0xff]
        %v284 = vld [vmem:[%s214 + $0xa0] sm:$0xff]
        %v285 = vld [vmem:[%s214 + $0xa8] sm:$0xff]
        %v286 = vld [vmem:[%s214 + $0xb0] sm:$0xff]
        %v287 = vld [vmem:[%s214 + $0xb8] sm:$0xff]
        %v288 = vld [vmem:[%s214 + $0xc0] sm:$0xff]
        %v289 = vld [vmem:[%s214 + $0xc8] sm:$0xff]
        %v290 = vld [vmem:[%s214 + $0xd0] sm:$0xff]
        %v291 = vld [vmem:[%s214 + $0xd8] sm:$0xff]
        %v292 = vld [vmem:[%s214 + $0xe0] sm:$0xff]
        %v293 = vld [vmem:[%s214 + $0xe8] sm:$0xff]
        %v294 = vld [vmem:[%s214 + $0xf0] sm:$0xff]
        %v295 = vld [vmem:[%s214 + $0xf8] sm:$0xff]
        %v296 = vld [vmem:[%s214 + $0x100] sm:$0xff]
        %v297 = vld [vmem:[%s214 + $0x108] sm:$0xff]
        %v298 = vld [vmem:[%s214 + $0x110] sm:$0xff]
        %v299 = vld [vmem:[%s214 + $0x118] sm:$0xff]
        %v300 = vld [vmem:[%s214 + $0x120] sm:$0xff]
        %v301 = vld [vmem:[%s214 + $0x128] sm:$0xff]
        %v302 = vld [vmem:[%s214 + $0x130] sm:$0xff]
        %v303 = vld [vmem:[%s214 + $0x138] sm:$0xff]
        %v304 = vld [vmem:[%s214 + $0x140] sm:$0xff]
        %v305 = vld [vmem:[%s214 + $0x148] sm:$0xff]
        %v306 = vld [vmem:[%s214 + $0x150] sm:$0xff]
        %v307 = vld [vmem:[%s214 + $0x158] sm:$0xff]
        %v308 = vld [vmem:[%s214 + $0x160] sm:$0xff]
        %v309 = vld [vmem:[%s214 + $0x168] sm:$0xff]
        %v310 = vld [vmem:[%s214 + $0x170] sm:$0xff]
        %v311 = vld [vmem:[%s214 + $0x178] sm:$0xff]
        %v312 = vld [vmem:[%s214 + $0x180] sm:$0xff]
        %v313 = vld [vmem:[%s214 + $0x188] sm:$0xff]
        %v314 = vld [vmem:[%s214 + $0x190] sm:$0xff]
        %v315 = vld [vmem:[%s214 + $0x198] sm:$0xff]
        %v316 = vld [vmem:[%s214 + $0x1a0] sm:$0xff]
        %v317 = vld [vmem:[%s214 + $0x1a8] sm:$0xff]
        %v318 = vld [vmem:[%s214 + $0x1b0] sm:$0xff]
        %v319 = vld [vmem:[%s214 + $0x1b8] sm:$0xff]
        %v320 = vld [vmem:[%s214 + $0x1c0] sm:$0xff]
        %v321 = vld [vmem:[%s214 + $0x1c8] sm:$0xff]
        %v322 = vld [vmem:[%s214 + $0x1d0] sm:$0xff]
        %v323 = vld [vmem:[%s214 + $0x1d8] sm:$0xff]
        %v324 = vld [vmem:[%s214 + $0x1e0] sm:$0xff]
        %v325 = vld [vmem:[%s214 + $0x1e8] sm:$0xff]
        %v326 = vld [vmem:[%s214 + $0x1f0] sm:$0xff]
        %v327 = vld [vmem:[%s214 + $0x1f8] sm:$0xff]
        %v328 = vld [vmem:[%s214 + $0x200] sm:$0xff]
        %v329 = vld [vmem:[%s214 + $0x208] sm:$0xff]
        %v330 = vld [vmem:[%s214 + $0x210] sm:$0xff]
        %v331 = vld [vmem:[%s214 + $0x218] sm:$0xff]
        %v332 = vld [vmem:[%s214 + $0x220] sm:$0xff]
        %v333 = vld [vmem:[%s214 + $0x228] sm:$0xff]
        %v334 = vld [vmem:[%s214 + $0x230] sm:$0xff]
        %v335 = vld [vmem:[%s214 + $0x238] sm:$0xff]
        %v336 = vld [vmem:[%s214 + $0x240] sm:$0xff]
        %v337 = vld [vmem:[%s214 + $0x248] sm:$0xff]
        %v338 = vld [vmem:[%s214 + $0x250] sm:$0xff]
        %v339 = vld [vmem:[%s214 + $0x258] sm:$0xff]
        %v340 = vld [vmem:[%s214 + $0x260] sm:$0xff]
        %v341 = vld [vmem:[%s214 + $0x268] sm:$0xff]
        %v342 = vld [vmem:[%s214 + $0x270] sm:$0xff]
        %v343 = vld [vmem:[%s214 + $0x278] sm:$0xff]
        %v344 = vld [vmem:[%s214 + $0x280] sm:$0xff]
        %v345 = vld [vmem:[%s214 + $0x288] sm:$0xff]
        %v346 = vld [vmem:[%s214 + $0x290] sm:$0xff]
        %v347 = vld [vmem:[%s214 + $0x298] sm:$0xff]
        %v348 = vld [vmem:[%s214 + $0x2a0] sm:$0xff]
        %v349 = vld [vmem:[%s214 + $0x2a8] sm:$0xff]
        %v350 = vld [vmem:[%s214 + $0x2b0] sm:$0xff]
        %v351 = vld [vmem:[%s214 + $0x2b8] sm:$0xff]
        %v352 = vld [vmem:[%s214 + $0x2c0] sm:$0xff]
        %v353 = vld [vmem:[%s214 + $0x2c8] sm:$0xff]
        %v354 = vld [vmem:[%s214 + $0x2d0] sm:$0xff]
        %v355 = vld [vmem:[%s214 + $0x2d8] sm:$0xff]
        %v356 = vld [vmem:[%s214 + $0x2e0] sm:$0xff]
        %v357 = vld [vmem:[%s214 + $0x2e8] sm:$0xf]
        %v358 = vld [vmem:[%s223] sm:$0xff]
        %v359 = vld [vmem:[%s223 + $0x8] sm:$0xff]
        %v360 = vld [vmem:[%s223 + $0x10] sm:$0xff]
        %v361 = vld [vmem:[%s223 + $0x18] sm:$0xff]
        %v362 = vld [vmem:[%s223 + $0x20] sm:$0xff]
        %v363 = vld [vmem:[%s223 + $0x28] sm:$0xff]
        %v364 = vld [vmem:[%s223 + $0x30] sm:$0xff]
        %v365 = vld [vmem:[%s223 + $0x38] sm:$0xff]
        %v366 = vld [vmem:[%s223 + $0x40] sm:$0xff]
        %v367 = vld [vmem:[%s223 + $0x48] sm:$0xff]
        %v368 = vld [vmem:[%s223 + $0x50] sm:$0xff]
        %v369 = vld [vmem:[%s223 + $0x58] sm:$0xff]
        %v370 = vld [vmem:[%s223 + $0x60] sm:$0xff]
        %v371 = vld [vmem:[%s223 + $0x68] sm:$0xff]
        %v372 = vld [vmem:[%s223 + $0x70] sm:$0xff]
        %v373 = vld [vmem:[%s223 + $0x78] sm:$0xff]
        %v374 = vld [vmem:[%s223 + $0x80] sm:$0xff]
        %v375 = vld [vmem:[%s223 + $0x88] sm:$0xff]
        %v376 = vld [vmem:[%s223 + $0x90] sm:$0xff]
        %v377 = vld [vmem:[%s223 + $0x98] sm:$0xff]
        %v378 = vld [vmem:[%s223 + $0xa0] sm:$0xff]
        %v379 = vld [vmem:[%s223 + $0xa8] sm:$0xff]
        %v380 = vld [vmem:[%s223 + $0xb0] sm:$0xff]
        %v381 = vld [vmem:[%s223 + $0xb8] sm:$0xff]
        %v382 = vld [vmem:[%s223 + $0xc0] sm:$0xff]
        %v383 = vld [vmem:[%s223 + $0xc8] sm:$0xff]
        %v384 = vld [vmem:[%s223 + $0xd0] sm:$0xff]
        %v385 = vld [vmem:[%s223 + $0xd8] sm:$0xff]
        %v386 = vld [vmem:[%s223 + $0xe0] sm:$0xff]
        %v387 = vld [vmem:[%s223 + $0xe8] sm:$0xff]
        %v388 = vld [vmem:[%s223 + $0xf0] sm:$0xff]
        %v389 = vld [vmem:[%s223 + $0xf8] sm:$0xff]
        %v390 = vld [vmem:[%s223 + $0x100] sm:$0xff]
        %v391 = vld [vmem:[%s223 + $0x108] sm:$0xff]
        %v392 = vld [vmem:[%s223 + $0x110] sm:$0xff]
        %v393 = vld [vmem:[%s223 + $0x118] sm:$0xff]
        %v394 = vld [vmem:[%s223 + $0x120] sm:$0xff]
        %v395 = vld [vmem:[%s223 + $0x128] sm:$0xff]
        %v396 = vld [vmem:[%s223 + $0x130] sm:$0xff]
        %v397 = vld [vmem:[%s223 + $0x138] sm:$0xff]
        %v398 = vld [vmem:[%s223 + $0x140] sm:$0xff]
        %v399 = vld [vmem:[%s223 + $0x148] sm:$0xff]
        %v400 = vld [vmem:[%s223 + $0x150] sm:$0xff]
        %v401 = vld [vmem:[%s223 + $0x158] sm:$0xff]
        %v402 = vld [vmem:[%s223 + $0x160] sm:$0xff]
        %v403 = vld [vmem:[%s223 + $0x168] sm:$0xff]
        %v404 = vld [vmem:[%s223 + $0x170] sm:$0xff]
        %v405 = vld [vmem:[%s223 + $0x178] sm:$0xff]
        %v406 = vld [vmem:[%s223 + $0x180] sm:$0xff]
        %v407 = vld [vmem:[%s223 + $0x188] sm:$0xff]
        %v408 = vld [vmem:[%s223 + $0x190] sm:$0xff]
        %v409 = vld [vmem:[%s223 + $0x198] sm:$0xff]
        %v410 = vld [vmem:[%s223 + $0x1a0] sm:$0xff]
        %v411 = vld [vmem:[%s223 + $0x1a8] sm:$0xff]
        %v412 = vld [vmem:[%s223 + $0x1b0] sm:$0xff]
        %v413 = vld [vmem:[%s223 + $0x1b8] sm:$0xff]
        %v414 = vld [vmem:[%s223 + $0x1c0] sm:$0xff]
        %v415 = vld [vmem:[%s223 + $0x1c8] sm:$0xff]
        %v416 = vld [vmem:[%s223 + $0x1d0] sm:$0xff]
        %v417 = vld [vmem:[%s223 + $0x1d8] sm:$0xff]
        %v418 = vld [vmem:[%s223 + $0x1e0] sm:$0xff]
        %v419 = vld [vmem:[%s223 + $0x1e8] sm:$0xff]
        %v420 = vld [vmem:[%s223 + $0x1f0] sm:$0xff]
        %v421 = vld [vmem:[%s223 + $0x1f8] sm:$0xff]
        %v422 = vld [vmem:[%s223 + $0x200] sm:$0xff]
        %v423 = vld [vmem:[%s223 + $0x208] sm:$0xff]
        %v424 = vld [vmem:[%s223 + $0x210] sm:$0xff]
        %v425 = vld [vmem:[%s223 + $0x218] sm:$0xff]
        %v426 = vld [vmem:[%s223 + $0x220] sm:$0xff]
        %v427 = vld [vmem:[%s223 + $0x228] sm:$0xff]
        %v428 = vld [vmem:[%s223 + $0x230] sm:$0xff]
        %v429 = vld [vmem:[%s223 + $0x238] sm:$0xff]
        %v430 = vld [vmem:[%s223 + $0x240] sm:$0xff]
        %v431 = vld [vmem:[%s223 + $0x248] sm:$0xff]
        %v432 = vld [vmem:[%s223 + $0x250] sm:$0xff]
        %v433 = vld [vmem:[%s223 + $0x258] sm:$0xff]
        %v434 = vld [vmem:[%s223 + $0x260] sm:$0xff]
        %v435 = vld [vmem:[%s223 + $0x268] sm:$0xff]
        %v436 = vld [vmem:[%s223 + $0x270] sm:$0xff]
        %v437 = vld [vmem:[%s223 + $0x278] sm:$0xff]
        %v438 = vld [vmem:[%s223 + $0x280] sm:$0xff]
        %v439 = vld [vmem:[%s223 + $0x288] sm:$0xff]
        %v440 = vld [vmem:[%s223 + $0x290] sm:$0xff]
        %v441 = vld [vmem:[%s223 + $0x298] sm:$0xff]
        %v442 = vld [vmem:[%s223 + $0x2a0] sm:$0xff]
        %v443 = vld [vmem:[%s223 + $0x2a8] sm:$0xff]
        %v444 = vld [vmem:[%s223 + $0x2b0] sm:$0xff]
        %v445 = vld [vmem:[%s223 + $0x2b8] sm:$0xff]
        %v446 = vld [vmem:[%s223 + $0x2c0] sm:$0xff]
        %v447 = vld [vmem:[%s223 + $0x2c8] sm:$0xff]
        %v448 = vld [vmem:[%s223 + $0x2d0] sm:$0xff]
        %v449 = vld [vmem:[%s223 + $0x2d8] sm:$0xff]
        %v450 = vld [vmem:[%s223 + $0x2e0] sm:$0xff]
        %v451 = vld [vmem:[%s223 + $0x2e8] sm:$0xf]
        %v452 = vadd.f32 %v264, %v358
        %v453 = vadd.f32 %v265, %v359
        %v454 = vadd.f32 %v266, %v360
        %v455 = vadd.f32 %v267, %v361
        %v456 = vadd.f32 %v268, %v362
        %v457 = vadd.f32 %v269, %v363
        %v458 = vadd.f32 %v270, %v364
        %v459 = vadd.f32 %v271, %v365
        %v460 = vadd.f32 %v272, %v366
        %v461 = vadd.f32 %v273, %v367
        %v462 = vadd.f32 %v274, %v368
        %v463 = vadd.f32 %v275, %v369
        %v464 = vadd.f32 %v276, %v370
        %v465 = vadd.f32 %v277, %v371
        %v466 = vadd.f32 %v278, %v372
        %v467 = vadd.f32 %v279, %v373
        %v468 = vadd.f32 %v280, %v374
        %v469 = vadd.f32 %v281, %v375
        %v470 = vadd.f32 %v282, %v376
        %v471 = vadd.f32 %v283, %v377
        %v472 = vadd.f32 %v284, %v378
        %v473 = vadd.f32 %v285, %v379
        %v474 = vadd.f32 %v286, %v380
        %v475 = vadd.f32 %v287, %v381
        %v476 = vadd.f32 %v288, %v382
        %v477 = vadd.f32 %v289, %v383
        %v478 = vadd.f32 %v290, %v384
        %v479 = vadd.f32 %v291, %v385
        %v480 = vadd.f32 %v292, %v386
        %v481 = vadd.f32 %v293, %v387
        %v482 = vadd.f32 %v294, %v388
        %v483 = vadd.f32 %v295, %v389
        %v484 = vadd.f32 %v296, %v390
        %v485 = vadd.f32 %v297, %v391
        %v486 = vadd.f32 %v298, %v392
        %v487 = vadd.f32 %v299, %v393
        %v488 = vadd.f32 %v300, %v394
        %v489 = vadd.f32 %v301, %v395
        %v490 = vadd.f32 %v302, %v396
        %v491 = vadd.f32 %v303, %v397
        %v492 = vadd.f32 %v304, %v398
        %v493 = vadd.f32 %v305, %v399
        %v494 = vadd.f32 %v306, %v400
        %v495 = vadd.f32 %v307, %v401
        %v496 = vadd.f32 %v308, %v402
        %v497 = vadd.f32 %v309, %v403
        %v498 = vadd.f32 %v310, %v404
        %v499 = vadd.f32 %v311, %v405
        %v500 = vadd.f32 %v312, %v406
        %v501 = vadd.f32 %v313, %v407
        %v502 = vadd.f32 %v314, %v408
        %v503 = vadd.f32 %v315, %v409
        %v504 = vadd.f32 %v316, %v410
        %v505 = vadd.f32 %v317, %v411
        %v506 = vadd.f32 %v318, %v412
        %v507 = vadd.f32 %v319, %v413
        %v508 = vadd.f32 %v320, %v414
        %v509 = vadd.f32 %v321, %v415
        %v510 = vadd.f32 %v322, %v416
        %v511 = vadd.f32 %v323, %v417
        %v512 = vadd.f32 %v324, %v418
        %v513 = vadd.f32 %v325, %v419
        %v514 = vadd.f32 %v326, %v420
        %v515 = vadd.f32 %v327, %v421
        %v516 = vadd.f32 %v328, %v422
        %v517 = vadd.f32 %v329, %v423
        %v518 = vadd.f32 %v330, %v424
        %v519 = vadd.f32 %v331, %v425
        %v520 = vadd.f32 %v332, %v426
        %v521 = vadd.f32 %v333, %v427
        %v522 = vadd.f32 %v334, %v428
        %v523 = vadd.f32 %v335, %v429
        %v524 = vadd.f32 %v336, %v430
        %v525 = vadd.f32 %v337, %v431
        %v526 = vadd.f32 %v338, %v432
        %v527 = vadd.f32 %v339, %v433
        %v528 = vadd.f32 %v340, %v434
        %v529 = vadd.f32 %v341, %v435
        %v530 = vadd.f32 %v342, %v436
        %v531 = vadd.f32 %v343, %v437
        %v532 = vadd.f32 %v344, %v438
        %v533 = vadd.f32 %v345, %v439
        %v534 = vadd.f32 %v346, %v440
        %v535 = vadd.f32 %v347, %v441
        %v536 = vadd.f32 %v348, %v442
        %v537 = vadd.f32 %v349, %v443
        %v538 = vadd.f32 %v350, %v444
        %v539 = vadd.f32 %v351, %v445
        %v540 = vadd.f32 %v352, %v446
        %v541 = vadd.f32 %v353, %v447
        %v542 = vadd.f32 %v354, %v448
        %v543 = vadd.f32 %v355, %v449
        %v544 = vadd.f32 %v356, %v450
        %v545 = vadd.f32 %v357, %v451
        %546 = vst [vmem:[%s248] sm:$0xff] %v452
        %547 = vst [vmem:[%s248 + $0x8] sm:$0xff] %v453
        %548 = vst [vmem:[%s248 + $0x10] sm:$0xff] %v454
        %549 = vst [vmem:[%s248 + $0x18] sm:$0xff] %v455
        %550 = vst [vmem:[%s248 + $0x20] sm:$0xff] %v456
        %551 = vst [vmem:[%s248 + $0x28] sm:$0xff] %v457
        %552 = vst [vmem:[%s248 + $0x30] sm:$0xff] %v458
        %553 = vst [vmem:[%s248 + $0x38] sm:$0xff] %v459
        %554 = vst [vmem:[%s248 + $0x40] sm:$0xff] %v460
        %555 = vst [vmem:[%s248 + $0x48] sm:$0xff] %v461
        %556 = vst [vmem:[%s248 + $0x50] sm:$0xff] %v462
        %557 = vst [vmem:[%s248 + $0x58] sm:$0xff] %v463
        %558 = vst [vmem:[%s248 + $0x60] sm:$0xff] %v464
        %559 = vst [vmem:[%s248 + $0x68] sm:$0xff] %v465
        %560 = vst [vmem:[%s248 + $0x70] sm:$0xff] %v466
        %561 = vst [vmem:[%s248 + $0x78] sm:$0xff] %v467
        %562 = vst [vmem:[%s248 + $0x80] sm:$0xff] %v468
        %563 = vst [vmem:[%s248 + $0x88] sm:$0xff] %v469
        %564 = vst [vmem:[%s248 + $0x90] sm:$0xff] %v470
        %565 = vst [vmem:[%s248 + $0x98] sm:$0xff] %v471
        %566 = vst [vmem:[%s248 + $0xa0] sm:$0xff] %v472
        %567 = vst [vmem:[%s248 + $0xa8] sm:$0xff] %v473
        %568 = vst [vmem:[%s248 + $0xb0] sm:$0xff] %v474
        %569 = vst [vmem:[%s248 + $0xb8] sm:$0xff] %v475
        %570 = vst [vmem:[%s248 + $0xc0] sm:$0xff] %v476
        %571 = vst [vmem:[%s248 + $0xc8] sm:$0xff] %v477
        %572 = vst [vmem:[%s248 + $0xd0] sm:$0xff] %v478
        %573 = vst [vmem:[%s248 + $0xd8] sm:$0xff] %v479
        %574 = vst [vmem:[%s248 + $0xe0] sm:$0xff] %v480
        %575 = vst [vmem:[%s248 + $0xe8] sm:$0xff] %v481
        %576 = vst [vmem:[%s248 + $0xf0] sm:$0xff] %v482
        %577 = vst [vmem:[%s248 + $0xf8] sm:$0xff] %v483
        %578 = vst [vmem:[%s248 + $0x100] sm:$0xff] %v484
        %579 = vst [vmem:[%s248 + $0x108] sm:$0xff] %v485
        %580 = vst [vmem:[%s248 + $0x110] sm:$0xff] %v486
        %581 = vst [vmem:[%s248 + $0x118] sm:$0xff] %v487
        %582 = vst [vmem:[%s248 + $0x120] sm:$0xff] %v488
        %583 = vst [vmem:[%s248 + $0x128] sm:$0xff] %v489
        %584 = vst [vmem:[%s248 + $0x130] sm:$0xff] %v490
        %585 = vst [vmem:[%s248 + $0x138] sm:$0xff] %v491
        %586 = vst [vmem:[%s248 + $0x140] sm:$0xff] %v492
        %587 = vst [vmem:[%s248 + $0x148] sm:$0xff] %v493
        %588 = vst [vmem:[%s248 + $0x150] sm:$0xff] %v494
        %589 = vst [vmem:[%s248 + $0x158] sm:$0xff] %v495
        %590 = vst [vmem:[%s248 + $0x160] sm:$0xff] %v496
        %591 = vst [vmem:[%s248 + $0x168] sm:$0xff] %v497
        %592 = vst [vmem:[%s248 + $0x170] sm:$0xff] %v498
        %593 = vst [vmem:[%s248 + $0x178] sm:$0xff] %v499
        %594 = vst [vmem:[%s248 + $0x180] sm:$0xff] %v500
        %595 = vst [vmem:[%s248 + $0x188] sm:$0xff] %v501
        %596 = vst [vmem:[%s248 + $0x190] sm:$0xff] %v502
        %597 = vst [vmem:[%s248 + $0x198] sm:$0xff] %v503
        %598 = vst [vmem:[%s248 + $0x1a0] sm:$0xff] %v504
        %599 = vst [vmem:[%s248 + $0x1a8] sm:$0xff] %v505
        %600 = vst [vmem:[%s248 + $0x1b0] sm:$0xff] %v506
        %601 = vst [vmem:[%s248 + $0x1b8] sm:$0xff] %v507
        %602 = vst [vmem:[%s248 + $0x1c0] sm:$0xff] %v508
        %603 = vst [vmem:[%s248 + $0x1c8] sm:$0xff] %v509
        %604 = vst [vmem:[%s248 + $0x1d0] sm:$0xff] %v510
        %605 = vst [vmem:[%s248 + $0x1d8] sm:$0xff] %v511
        %606 = vst [vmem:[%s248 + $0x1e0] sm:$0xff] %v512
        %607 = vst [vmem:[%s248 + $0x1e8] sm:$0xff] %v513
        %608 = vst [vmem:[%s248 + $0x1f0] sm:$0xff] %v514
        %609 = vst [vmem:[%s248 + $0x1f8] sm:$0xff] %v515
        %610 = vst [vmem:[%s248 + $0x200] sm:$0xff] %v516
        %611 = vst [vmem:[%s248 + $0x208] sm:$0xff] %v517
        %612 = vst [vmem:[%s248 + $0x210] sm:$0xff] %v518
        %613 = vst [vmem:[%s248 + $0x218] sm:$0xff] %v519
        %614 = vst [vmem:[%s248 + $0x220] sm:$0xff] %v520
        %615 = vst [vmem:[%s248 + $0x228] sm:$0xff] %v521
        %616 = vst [vmem:[%s248 + $0x230] sm:$0xff] %v522
        %617 = vst [vmem:[%s248 + $0x238] sm:$0xff] %v523
        %618 = vst [vmem:[%s248 + $0x240] sm:$0xff] %v524
        %619 = vst [vmem:[%s248 + $0x248] sm:$0xff] %v525
        %620 = vst [vmem:[%s248 + $0x250] sm:$0xff] %v526
        %621 = vst [vmem:[%s248 + $0x258] sm:$0xff] %v527
        %622 = vst [vmem:[%s248 + $0x260] sm:$0xff] %v528
        %623 = vst [vmem:[%s248 + $0x268] sm:$0xff] %v529
        %624 = vst [vmem:[%s248 + $0x270] sm:$0xff] %v530
        %625 = vst [vmem:[%s248 + $0x278] sm:$0xff] %v531
        %626 = vst [vmem:[%s248 + $0x280] sm:$0xff] %v532
        %627 = vst [vmem:[%s248 + $0x288] sm:$0xff] %v533
        %628 = vst [vmem:[%s248 + $0x290] sm:$0xff] %v534
        %629 = vst [vmem:[%s248 + $0x298] sm:$0xff] %v535
        %630 = vst [vmem:[%s248 + $0x2a0] sm:$0xff] %v536
        %631 = vst [vmem:[%s248 + $0x2a8] sm:$0xff] %v537
        %632 = vst [vmem:[%s248 + $0x2b0] sm:$0xff] %v538
        %633 = vst [vmem:[%s248 + $0x2b8] sm:$0xff] %v539
        %634 = vst [vmem:[%s248 + $0x2c0] sm:$0xff] %v540
        %635 = vst [vmem:[%s248 + $0x2c8] sm:$0xff] %v541
        %636 = vst [vmem:[%s248 + $0x2d0] sm:$0xff] %v542
        %637 = vst [vmem:[%s248 + $0x2d8] sm:$0xff] %v543
        %638 = vst [vmem:[%s248 + $0x2e0] sm:$0xff] %v544
        %639 = vst [vmem:[%s248 + $0x2e8] sm:$0xf] %v545
        %s640 = sand.u32 %s113, 1
        %s641 = scalar_lea.sflag [#allocation4], %s640
        %s642 = sand.u32 %s113, 1
        %s643 = smul.addr %s642, 748
        %s644 = scalar_lea.vmem [#allocation7], %s643
        // Predicated region
        $region37: #{tpu_custom_call.1} parent=27 // pred_check
          %p645 = pneg %p123
        $region38: #{tpu_custom_call.1} parent=27 // pred_check_branch
          %647 = sbr.rel (%p645) target = $region40
        $region39: #{tpu_custom_call.1} parent=27 // pred_region
          %s648 = smul.u32 187, %s29
          %s649 = ssub.s32 375, %s648
          %p650 = scmp.lt.s32.totalorder %s649, 187
          %s651 = scalar_select %p650, %s649, 187
          %s652 = smul.u32 64, %s651
          %s654 = ssub.s32 11968, %s652
          %655 = vsyncadd %s641, %s654
          %p656 = scmp.ne.s32.totalorder 0, %s652
          %s657 = smul.addr %s28, 375
          %s658 = sadd.s32 %s648, %s657
          %s659 = smul.addr %s27, 375
          %s660 = sadd.s32 %s658, %s659
          %s661 = smul.addr %s660, 64
          %s662 = scalar_lea.hbm %s2, %s661
          %s663 = smul.u32 %s651, 4
          %s664 = sshll.u32 %s663, 4
          %s665 = sshll.u32 %s644, 4
          %s666 = int_to_ptr.vmem [resolvable:$true] %s665
          %668 = dma.vmem_to_hbm [thread:$0]  (%p656), %s666, %s664, %s662, %s641
        $region40: #{tpu_custom_call.1} parent=27 // pred_fallthru
          _
      $region28: #{tpu_custom_call.1} parent=5 // pred_fallthru
        _
      %p669 = scmp.le.s32.totalorder 2, %s17
      // Predicated region
      $region41: #{tpu_custom_call.1} parent=5 // pred_check
        %p670 = pneg %p669
      $region42: #{tpu_custom_call.1} parent=5 // pred_check_branch
        %672 = sbr.rel (%p670) target = $region44
      $region43: #{tpu_custom_call.1} parent=5 // pred_region
        %s673 = ssub.s32 %s17, 2
        // Predicated region
        $region45: #{tpu_custom_call.1} parent=43 // pred_check
          %p674 = pneg %p129
        $region46: #{tpu_custom_call.1} parent=43 // pred_check_branch
          %676 = sbr.rel (%p674) target = $region48
        $region47: #{tpu_custom_call.1} parent=43 // pred_region
          %s677 = sand.u32 %s114, 1
          %s678 = scalar_lea.sflag [#allocation4], %s677
          %s679 = sand.u32 %s114, 1
          %s680 = smul.addr %s679, 748
          %s681 = scalar_lea.vmem [#allocation7], %s680
          %682 = dma.done %s678, 11968
        $region48: #{tpu_custom_call.1} parent=43 // pred_fallthru
          _
      $region44: #{tpu_custom_call.1} parent=5 // pred_fallthru
        _
    $region6: #{tpu_custom_call.1} parent=1 // loop_footer
      %s21 = sadd.s32 1, %s17
    $region7: #{tpu_custom_call.1} parent=1 // loop_footer_branch
      %16 = sbr.rel target = $region3
    $region8: #{tpu_custom_call.1} parent=1 // loop_exit
      _
    %683 = vsyncpa [#allocation3], 1
    %s684 = scalar_lea.sflag [#allocation3], 1
    %685 = vsyncpa %s684, 1
    %686 = vsyncpa [#allocation6], 1
    %s687 = scalar_lea.sflag [#allocation6], 1
    %688 = vsyncpa %s687, 1
    %689 = vsyncpa [#allocation4], 1
    %s690 = scalar_lea.sflag [#allocation4], 1
    %691 = vsyncpa %s690, 1

</llo_original>
